<compile_context>
chip_gen: v7x
topology: tpu7x:2x2x1
jax: 0.10.0
libtpu: 0.0.40
codegen_flags: <defaults>
</compile_context>

<pallas_src>
import functools

import jax
import jax.numpy as jnp
from jax.experimental import pallas as pl
from jax.experimental.pallas import tpu as pltpu

_LANES = 128
_BLOCK_ROWS = 2048  # f32: 2048*128*4B = 1 MiB per input tile


def _plan(rows: int):
    """Static tiling plan: (block_rows, num_cores, blocks_per_core, needs_mask)."""
    block_rows = rows if rows <= _BLOCK_ROWS else _BLOCK_ROWS
    n_blocks = -(-rows // block_rows)
    needs_mask = (rows % block_rows) != 0
    # v7x megacore: split the streaming reduction across 2 TensorCores via a
    # leading "parallel" axis with per-core partial outputs.  Only enabled when
    # the block count splits evenly so no index_map ever points past the array.
    num_cores = 2 if (n_blocks >= 2 and n_blocks % 2 == 0) else 1
    blocks_per_core = n_blocks // num_cores
    return block_rows, num_cores, blocks_per_core, needs_mask


def _row_mask(c, i, shape, rows, block_rows, blocks_per_core):
    start = (c * blocks_per_core + i) * block_rows
    row_ids = start + jax.lax.broadcasted_iota(jnp.int32, shape, 0)
    return row_ids < rows


def _sums_kernel(x_ref, y_ref, out_ref, acc_x, acc_y, *,
                 rows, block_rows, blocks_per_core, needs_mask):
    c = pl.program_id(0)
    i = pl.program_id(1)

    @pl.when(i == 0)
    def _():
        acc_x[...] = jnp.zeros_like(acc_x)
        acc_y[...] = jnp.zeros_like(acc_y)

    x = x_ref[...].astype(jnp.float32)
    y = y_ref[...].astype(jnp.float32)
    if needs_mask:
        m = _row_mask(c, i, x.shape, rows, block_rows, blocks_per_core)
        x = jnp.where(m, x, 0.0)
        y = jnp.where(m, y, 0.0)

    # VMEM vector accumulators: per-step work stays on the VPU (no per-step
    # cross-lane reduce, no SMEM scalar carried dependency).
    acc_x[...] += x
    acc_y[...] += y

    @pl.when(i == pl.num_programs(1) - 1)
    def _():
        out_ref[0, 0] = jnp.sum(acc_x[...])
        out_ref[0, 1] = jnp.sum(acc_y[...])


def _sid_kernel(sums_ref, x_ref, y_ref, out_ref, acc, *,
                rows, block_rows, blocks_per_core, needs_mask, eps):
    c = pl.program_id(0)
    i = pl.program_id(1)

    @pl.when(i == 0)
    def _():
        acc[...] = jnp.zeros_like(acc)

    inv_sx = 1.0 / sums_ref[0]
    inv_sy = 1.0 / sums_ref[1]

    x = x_ref[...].astype(jnp.float32)
    y = y_ref[...].astype(jnp.float32)
    p = x * inv_sx + eps
    q = y * inv_sy + eps
    # p*log(p/q) + q*log(q/p) == (p - q) * (log(p) - log(q)):
    # half the transcendental (EUP) work of the naive 2-log + 2-divide form.
    term = (p - q) * (jnp.log(p) - jnp.log(q))

    if needs_mask:
        # Padded-region garbage may produce NaN in `term`; the select drops it
        # (NaN in the unselected branch does not propagate).
        m = _row_mask(c, i, term.shape, rows, block_rows, blocks_per_core)
        term = jnp.where(m, term, 0.0)

    acc[...] += term

    @pl.when(i == pl.num_programs(1) - 1)
    def _():
        out_ref[0, 0] = jnp.sum(acc[...])


def _global_sums(x2, y2, plan):
    rows = x2.shape[0]
    block_rows, num_cores, bpc, needs_mask = plan
    n_elems = rows * _LANES
    in_spec = pl.BlockSpec((block_rows, _LANES), lambda c, i: (c * bpc + i, 0))
    kernel = functools.partial(
        _sums_kernel, rows=rows, block_rows=block_rows,
        blocks_per_core=bpc, needs_mask=needs_mask)
    partials = pl.pallas_call(
        kernel,
        out_shape=jax.ShapeDtypeStruct((num_cores, 2), jnp.float32),
        grid_spec=pltpu.PrefetchScalarGridSpec(
            num_scalar_prefetch=0,
            grid=(num_cores, bpc),
            in_specs=[in_spec, in_spec],
            out_specs=pl.BlockSpec((1, 2), lambda c, i: (c, 0),
                                   memory_space=pltpu.SMEM),
            scratch_shapes=[pltpu.VMEM((block_rows, _LANES), jnp.float32),
                            pltpu.VMEM((block_rows, _LANES), jnp.float32)],
        ),
        compiler_params=pltpu.CompilerParams(
            dimension_semantics=("parallel", "arbitrary")),
        cost_estimate=pl.CostEstimate(
            flops=3 * n_elems, transcendentals=0,
            bytes_accessed=2 * n_elems * x2.dtype.itemsize + num_cores * 8),
    )(x2, y2)
    return jnp.sum(partials, axis=0)  # (2,): [sum(imfake), sum(imreal)]


def _divergence_sum(x2, y2, sums, plan, eps):
    rows = x2.shape[0]
    block_rows, num_cores, bpc, needs_mask = plan
    n_elems = rows * _LANES
    in_spec = pl.BlockSpec((block_rows, _LANES), lambda c, i: (c * bpc + i, 0))
    kernel = functools.partial(
        _sid_kernel, rows=rows, block_rows=block_rows,
        blocks_per_core=bpc, needs_mask=needs_mask, eps=eps)
    partials = pl.pallas_call(
        kernel,
        out_shape=jax.ShapeDtypeStruct((num_cores, 1), jnp.float32),
        grid_spec=pltpu.PrefetchScalarGridSpec(
            num_scalar_prefetch=0,
            grid=(num_cores, bpc),
            in_specs=[pl.BlockSpec(memory_space=pltpu.SMEM),  # global sums (2,)
                      in_spec, in_spec],
            out_specs=pl.BlockSpec((1, 1), lambda c, i: (c, 0),
                                   memory_space=pltpu.SMEM),
            scratch_shapes=[pltpu.VMEM((block_rows, _LANES), jnp.float32)],
        ),
        compiler_params=pltpu.CompilerParams(
            dimension_semantics=("parallel", "arbitrary")),
        cost_estimate=pl.CostEstimate(
            flops=8 * n_elems, transcendentals=2 * n_elems,
            bytes_accessed=2 * n_elems * x2.dtype.itemsize + 8 + num_cores * 4),
    )(sums, x2, y2)
    return jnp.sum(partials)


def loss_sid(imfake, imreal):
    """SID loss, matching the PyTorch Loss_SID.forward semantics."""
    assert imfake.shape == imreal.shape, "imfake and imreal must have same shape"
    b = imfake.shape[0]
    total = int(imfake.size)
    eps = float(jnp.finfo(jnp.float32).eps)  # == torch.finfo(torch.float).eps

    x = jnp.ravel(imfake)   # native dtype; cast to f32 only inside the kernel
    y = jnp.ravel(imreal)

    # Only pad to the next multiple of 128 lanes (usually a no-op for image
    # tensors).  Zero padding is exact for SID: padded elements give
    # p == q == eps, so their divergence term is exactly 0 and they add 0 to
    # the global sums.  Row-level raggedness vs. the big block is handled with
    # an in-kernel iota mask instead of a full-copy pad.
    rem = total % _LANES
    if rem:
        x = jnp.pad(x, (0, _LANES - rem))
        y = jnp.pad(y, (0, _LANES - rem))
    rows = x.shape[0] // _LANES
    x2 = x.reshape(rows, _LANES)
    y2 = y.reshape(rows, _LANES)

    plan = _plan(rows)
    sums = _global_sums(x2, y2, plan)
    div_total = _divergence_sum(x2, y2, sums, plan, eps)
    # mean over batch of per-row sums == (sum of all elementwise terms) / batch
    return div_total / jnp.float32(b)


if __name__ == "__main__":
    key = jax.random.PRNGKey(0)
    k1, k2 = jax.random.split(key)

    shape = (2, 4, 16, 16)
    # SID operates on non-negative (spectral / image) intensities.
    imfake = jax.random.uniform(k1, shape, dtype=jnp.float32, minval=0.05, maxval=1.0)
    imreal = jax.random.uniform(k2, shape, dtype=jnp.float32, minval=0.05, maxval=1.0)

    out = loss_sid(imfake, imreal)
    jax.block_until_ready(out)

    # plain-JAX reference mirroring the PyTorch module
    b = shape[0]
    eps = jnp.finfo(jnp.float32).eps
    p = imfake.reshape(b, -1) / jnp.sum(imfake) + eps
    q = imreal.reshape(b, -1) / jnp.sum(imreal) + eps
    ref = jnp.mean(jnp.sum(p * jnp.log(p / q) + q * jnp.log(q / p), axis=1))
    assert jnp.allclose(out, ref, rtol=1e-4, atol=1e-6), (out, ref)

    print("KERNEL_OK")
</pallas_src>

<mosaic_0001>
module attributes {stable_mosaic.version = 11 : i64} {
  func.func @_sums_kernel(%arg0: i32, %arg1: i32, %arg2: memref<16x128xf32, #tpu.memory_space<vmem>>, %arg3: memref<16x128xf32, #tpu.memory_space<vmem>>, %arg4: memref<1x2xf32, #tpu.memory_space<smem>>, %arg5: memref<16x128xf32, #tpu.memory_space<vmem>>, %arg6: memref<16x128xf32, #tpu.memory_space<vmem>>) attributes {dimension_semantics = [#tpu.dimension_semantics<parallel>, #tpu.dimension_semantics<arbitrary>], iteration_bounds = array<i64: 1, 1>, scalar_prefetch = 0 : i64, scratch_operands = 2 : i64, tpu.core_type = #tpu.core_type<tc>, window_params = [{transform_indices = @transform_0, window_bounds = array<i64: 16, 128>}, {transform_indices = @transform_1, window_bounds = array<i64: 16, 128>}, {transform_indices = @transform_2, window_bounds = array<i64: 1, 2>}]} {
    %c0_i32 = arith.constant 0 : i32
    %0 = arith.cmpi eq, %arg1, %c0_i32 : i32
    %1 = arith.extui %0 : i1 to i32
    %c0_i32_0 = arith.constant 0 : i32
    %2 = arith.cmpi ne, %1, %c0_i32_0 : i32
    scf.if %2 {
      %cst = arith.constant 0.000000e+00 : f32
      %14 = vector.broadcast %cst : f32 to vector<16x128xf32>
      %c0_14 = arith.constant 0 : index
      %c0_15 = arith.constant 0 : index
      %15 = vector.load %arg5[%c0_14, %c0_15] : memref<16x128xf32, #tpu.memory_space<vmem>>, vector<16x128xf32>
      tpu.vector_store %arg5[%c0_14, %c0_15], %14 {strides = array<i32>} : memref<16x128xf32, #tpu.memory_space<vmem>>, vector<16x128xf32>,
      %cst_16 = arith.constant 0.000000e+00 : f32
      %16 = vector.broadcast %cst_16 : f32 to vector<16x128xf32>
      %c0_17 = arith.constant 0 : index
      %c0_18 = arith.constant 0 : index
      %17 = vector.load %arg6[%c0_17, %c0_18] : memref<16x128xf32, #tpu.memory_space<vmem>>, vector<16x128xf32>
      tpu.vector_store %arg6[%c0_17, %c0_18], %16 {strides = array<i32>} : memref<16x128xf32, #tpu.memory_space<vmem>>, vector<16x128xf32>,
    } else {
    }
    %c0 = arith.constant 0 : index
    %c0_1 = arith.constant 0 : index
    %3 = vector.load %arg2[%c0, %c0_1] : memref<16x128xf32, #tpu.memory_space<vmem>>, vector<16x128xf32>
    %c0_2 = arith.constant 0 : index
    %c0_3 = arith.constant 0 : index
    %4 = vector.load %arg3[%c0_2, %c0_3] : memref<16x128xf32, #tpu.memory_space<vmem>>, vector<16x128xf32>
    %c0_4 = arith.constant 0 : index
    %c0_5 = arith.constant 0 : index
    %5 = vector.load %arg5[%c0_4, %c0_5] : memref<16x128xf32, #tpu.memory_space<vmem>>, vector<16x128xf32>
    %6 = arith.addf %5, %3 : vector<16x128xf32>
    %c0_6 = arith.constant 0 : index
    %c0_7 = arith.constant 0 : index
    %7 = vector.load %arg5[%c0_6, %c0_7] : memref<16x128xf32, #tpu.memory_space<vmem>>, vector<16x128xf32>
    tpu.vector_store %arg5[%c0_6, %c0_7], %6 {strides = array<i32>} : memref<16x128xf32, #tpu.memory_space<vmem>>, vector<16x128xf32>,
    %c0_8 = arith.constant 0 : index
    %c0_9 = arith.constant 0 : index
    %8 = vector.load %arg6[%c0_8, %c0_9] : memref<16x128xf32, #tpu.memory_space<vmem>>, vector<16x128xf32>
    %9 = arith.addf %8, %4 : vector<16x128xf32>
    %c0_10 = arith.constant 0 : index
    %c0_11 = arith.constant 0 : index
    %10 = vector.load %arg6[%c0_10, %c0_11] : memref<16x128xf32, #tpu.memory_space<vmem>>, vector<16x128xf32>
    tpu.vector_store %arg6[%c0_10, %c0_11], %9 {strides = array<i32>} : memref<16x128xf32, #tpu.memory_space<vmem>>, vector<16x128xf32>,
    %c0_i32_12 = arith.constant 0 : i32
    %11 = arith.cmpi eq, %arg1, %c0_i32_12 : i32
    %12 = arith.extui %11 : i1 to i32
    %c0_i32_13 = arith.constant 0 : i32
    %13 = arith.cmpi ne, %12, %c0_i32_13 : i32
    scf.if %13 {
      %c0_14 = arith.constant 0 : index
      %c0_15 = arith.constant 0 : index
      %14 = vector.load %arg5[%c0_14, %c0_15] : memref<16x128xf32, #tpu.memory_space<vmem>>, vector<16x128xf32>
      %15 = vector.shape_cast %14 : vector<16x128xf32> to vector<1x16x128xf32>
      %cst = arith.constant dense<0.000000e+00> : vector<1xf32>
      %16 = vector.multi_reduction <add>, %15, %cst [1, 2] : vector<1x16x128xf32> to vector<1xf32>
      %17 = vector.shape_cast %16 : vector<1xf32> to vector<1x1x1xf32>
      %18 = vector.extract %17[0, 0, 0] : f32 from vector<1x1x1xf32>
      %c0_16 = arith.constant 0 : index
      %c0_17 = arith.constant 0 : index
      %19 = memref.load %arg4[%c0_16, %c0_17] : memref<1x2xf32, #tpu.memory_space<smem>>
      memref.store %18, %arg4[%c0_16, %c0_17] : memref<1x2xf32, #tpu.memory_space<smem>>
      %c0_18 = arith.constant 0 : index
      %c0_19 = arith.constant 0 : index
      %20 = vector.load %arg6[%c0_18, %c0_19] : memref<16x128xf32, #tpu.memory_space<vmem>>, vector<16x128xf32>
      %21 = vector.shape_cast %20 : vector<16x128xf32> to vector<1x16x128xf32>
      %cst_20 = arith.constant dense<0.000000e+00> : vector<1xf32>
      %22 = vector.multi_reduction <add>, %21, %cst_20 [1, 2] : vector<1x16x128xf32> to vector<1xf32>
      %23 = vector.shape_cast %22 : vector<1xf32> to vector<1x1x1xf32>
      %24 = vector.extract %23[0, 0, 0] : f32 from vector<1x1x1xf32>
      %c0_21 = arith.constant 0 : index
      %c1 = arith.constant 1 : index
      %25 = memref.load %arg4[%c0_21, %c1] : memref<1x2xf32, #tpu.memory_space<smem>>
      memref.store %24, %arg4[%c0_21, %c1] : memref<1x2xf32, #tpu.memory_space<smem>>
    } else {
    }
    return
  }
  func.func @transform_0(%arg0: i32, %arg1: i32) -> (i32, i32) {
    %c1_i32 = arith.constant 1 : i32
    %0 = arith.muli %arg0, %c1_i32 : i32
    %1 = arith.addi %0, %arg1 : i32
    %c0_i32 = arith.constant 0 : i32
    %c0_i32_0 = arith.constant 0 : i32
    return %1, %c0_i32 : i32, i32
  }
  func.func @transform_1(%arg0: i32, %arg1: i32) -> (i32, i32) {
    %c1_i32 = arith.constant 1 : i32
    %0 = arith.muli %arg0, %c1_i32 : i32
    %1 = arith.addi %0, %arg1 : i32
    %c0_i32 = arith.constant 0 : i32
    %c0_i32_0 = arith.constant 0 : i32
    return %1, %c0_i32 : i32, i32
  }
  func.func @transform_2(%arg0: i32, %arg1: i32) -> (i32, i32) {
    %c0_i32 = arith.constant 0 : i32
    %c0_i32_0 = arith.constant 0 : i32
    return %arg0, %c0_i32 : i32, i32
  }
}

</mosaic_0001>

<llo_original>
// kernel: tpu_custom_call.1
$region0: #{tpu_custom_call.1}
  #allocation0 [shape = 'u32[]', space=smem, size = 0x4, offset = 0x4, fixed_abs, tag = 'smem constant byte address 0x4 - core index']
  #allocation1 [shape = 'u32[144,128]{1,0:T(1,128)}', space=vmem, size = 0x12000, scoped, tag = 'internal scratch']
  #allocation2 [shape = 'f32[16,128]{1,0:T(8,128)}', space=vmem, size = 0x2000, scoped, tag = 'scratch operand']
  #allocation3 [shape = 'f32[16,128]{1,0:T(8,128)}', space=vmem, size = 0x2000, scoped, tag = 'scratch operand']
  %s0 = inlined_call_operand.hbm [shape: f32[16,128], index: 0, kind: input, shape index: {}]
  %s1 = inlined_call_operand.hbm [shape: f32[16,128], index: 1, kind: input, shape index: {}]
  %s2 = inlined_call_operand.hbm [shape: f32[1,2], index: 2, kind: output, shape index: {}]
  %s3 = sld [smem:[#allocation0]]
  $region34: #{tpu_custom_call.1} parent=0
    _
  %s5 = ssub.s32 1, %s3
  %s6 = scalar_select 0, %s5, %s3
  $region1: #{tpu_custom_call.1} parent=0
    #allocation4 [shape = 'u8[8192]{0}', space=vmem, size = 0x2000, scoped, tag = 'input window, operand 0, single buffered']
    #allocation5 [shape = 's32[1]{0}', space=sflag, size = 0x4, scoped, tag = 'scoped memory for tpu_custom_call.1']
    #allocation6 [shape = 's32[1]{0}', space=sflag, size = 0x4, scoped, tag = 'scoped memory for tpu_custom_call.1']
    #allocation7 [shape = 'u8[8192]{0}', space=vmem, size = 0x2000, scoped, tag = 'input window, operand 1, single buffered']
    #allocation8 [shape = 's32[1]{0}', space=sflag, size = 0x4, scoped, tag = 'scoped memory for tpu_custom_call.1']
    #allocation9 [shape = 'u8[512]{0}', space=smem, size = 0x200, scoped, tag = 'output window, operand 0, single buffered']
    %7 = vsyncpa [#allocation5], 0
    %8 = vsyncpa [#allocation8], 0
    %9 = vsyncpa [#allocation6], 0
    // Predicated region
    $region2: #{tpu_custom_call.1} parent=1 // pred_check
      _
    $region3: #{tpu_custom_call.1} parent=1 // pred_check_branch
      %11 = sbr.rel (0) target = $region5
    $region4: #{tpu_custom_call.1} parent=1 // pred_region
      %s12 = sadd.s32 0, 0
      %s13 = smul.u32 2, %s12
      %s15 = ssub.s32 256, 256
      %16 = vsyncadd [#allocation5], %s15
      %s17 = smul.addr %s13, 128
      %s18 = scalar_lea.hbm %s0, %s17
      %s19 = sshll.u32 [#allocation4], 4
      %s20 = int_to_ptr.vmem [resolvable:$true] %s19
      %25 = dma.hbm_to_vmem [thread:$0]  %s18, 256, %s20, [#allocation5], 128, 128, 8
    $region5: #{tpu_custom_call.1} parent=1 // pred_fallthru
      _
    // Predicated region
    $region6: #{tpu_custom_call.1} parent=1 // pred_check
      _
    $region7: #{tpu_custom_call.1} parent=1 // pred_check_branch
      %27 = sbr.rel (0) target = $region9
    $region8: #{tpu_custom_call.1} parent=1 // pred_region
      %s28 = sadd.s32 0, 0
      %s29 = smul.u32 2, %s28
      %s31 = ssub.s32 256, 256
      %32 = vsyncadd [#allocation8], %s31
      %s33 = smul.addr %s29, 128
      %s34 = scalar_lea.hbm %s1, %s33
      %s35 = sshll.u32 [#allocation7], 4
      %s36 = int_to_ptr.vmem [resolvable:$true] %s35
      %41 = dma.hbm_to_vmem [thread:$0]  %s34, 256, %s36, [#allocation8], 128, 128, 8
    $region9: #{tpu_custom_call.1} parent=1 // pred_fallthru
      _
    // Predicated region
    $region10: #{tpu_custom_call.1} parent=1 // pred_check
      _
    $region11: #{tpu_custom_call.1} parent=1 // pred_check_branch
      %43 = sbr.rel (0) target = $region13
    $region12: #{tpu_custom_call.1} parent=1 // pred_region
      %44 = dma.done [#allocation5], 256
    $region13: #{tpu_custom_call.1} parent=1 // pred_fallthru
      _
    // Predicated region
    $region14: #{tpu_custom_call.1} parent=1 // pred_check
      _
    $region15: #{tpu_custom_call.1} parent=1 // pred_check_branch
      %46 = sbr.rel (0) target = $region17
    $region16: #{tpu_custom_call.1} parent=1 // pred_region
      %47 = dma.done [#allocation8], 256
    $region17: #{tpu_custom_call.1} parent=1 // pred_fallthru
      _
    %s48 = sadd.s32 0, 0
    %s49 = smul.u32 2, %s48
    %s50 = sadd.s32 0, 0
    %s51 = smul.u32 2, %s50
    %p52 = scmp.eq.s32.totalorder 0, 0
    // Predicated region
    $region18: #{tpu_custom_call.1} parent=1 // pred_check
      %p53 = pneg %p52
    $region19: #{tpu_custom_call.1} parent=1 // pred_check_branch
      %55 = sbr.rel (%p53) target = $region21
    $region20: #{tpu_custom_call.1} parent=1 // pred_region
      %56 = vst [vmem:[#allocation2] sm:$0xff] 0.0
      %57 = vst [vmem:[#allocation2 + $0x8] sm:$0xff] 0.0
      %58 = vst [vmem:[#allocation3] sm:$0xff] 0.0
      %59 = vst [vmem:[#allocation3 + $0x8] sm:$0xff] 0.0
    $region21: #{tpu_custom_call.1} parent=1 // pred_fallthru
      _
    %v60 = vld [vmem:[#allocation4] sm:$0xff]
    %v61 = vld [vmem:[#allocation4 + $0x8] sm:$0xff]
    %v62 = vld [vmem:[#allocation7] sm:$0xff]
    %v63 = vld [vmem:[#allocation7 + $0x8] sm:$0xff]
    %v64 = vld [vmem:[#allocation2] sm:$0xff]
    %v65 = vld [vmem:[#allocation2 + $0x8] sm:$0xff]
    %v66 = vadd.f32 %v64, %v60
    %v67 = vadd.f32 %v65, %v61
    %68 = vst [vmem:[#allocation2] sm:$0xff] %v66
    %69 = vst [vmem:[#allocation2 + $0x8] sm:$0xff] %v67
    %v70 = vld [vmem:[#allocation3] sm:$0xff]
    %v71 = vld [vmem:[#allocation3 + $0x8] sm:$0xff]
    %v72 = vadd.f32 %v70, %v62
    %v73 = vadd.f32 %v71, %v63
    %74 = vst [vmem:[#allocation3] sm:$0xff] %v72
    %75 = vst [vmem:[#allocation3 + $0x8] sm:$0xff] %v73
    // Predicated region
    $region22: #{tpu_custom_call.1} parent=1 // pred_check
      %p76 = pneg %p52
    $region23: #{tpu_custom_call.1} parent=1 // pred_check_branch
      %78 = sbr.rel (%p76) target = $region25
    $region24: #{tpu_custom_call.1} parent=1 // pred_region
      %v79 = vld [vmem:[#allocation2] sm:$0xff]
      %v80 = vld [vmem:[#allocation2 + $0x8] sm:$0xff]
      %v81 = vadd.f32 %v79, %v80
      %82 = vadd.xlane.f32.xlu0 %v81
      %v83 = vpop.xlane.xlu0 %82
      %v84 = vrot.slane %v83, 4
      %v85 = vadd.f32 %v83, %v84
      %v86 = vrot.slane %v85, 2
      %v87 = vadd.f32 %v85, %v86
      %v88 = vrot.slane %v87, 1
      %v89 = vadd.f32 %v87, %v88
      %s90 = vtos %v89
      %s91 = scalar_lea.smem [#allocation9], 0
      %92 = sst [smem:[%s91]] %s90
      %v93 = vld [vmem:[#allocation3] sm:$0xff]
      %v94 = vld [vmem:[#allocation3 + $0x8] sm:$0xff]
      %v95 = vadd.f32 %v93, %v94
      %96 = vadd.xlane.f32.xlu0 %v95
      %v97 = vpop.xlane.xlu0 %96
      %v98 = vrot.slane %v97, 4
      %v99 = vadd.f32 %v97, %v98
      %v100 = vrot.slane %v99, 2
      %v101 = vadd.f32 %v99, %v100
      %v102 = vrot.slane %v101, 1
      %v103 = vadd.f32 %v101, %v102
      %s104 = vtos %v103
      %s105 = scalar_lea.smem [#allocation9], 1
      %106 = sst [smem:[%s105]] %s104
    $region25: #{tpu_custom_call.1} parent=1 // pred_fallthru
      _
    // Predicated region
    $region26: #{tpu_custom_call.1} parent=1 // pred_check
      _
    $region27: #{tpu_custom_call.1} parent=1 // pred_check_branch
      %108 = sbr.rel (0) target = $region29
    $region28: #{tpu_custom_call.1} parent=1 // pred_region
      %s110 = ssub.s32 16, 16
      %111 = vsyncadd [#allocation6], %s110
      %114 = dma.smem_to_hbm [#allocation9], 16, %s2, [#allocation6]
    $region29: #{tpu_custom_call.1} parent=1 // pred_fallthru
      _
    // Predicated region
    $region30: #{tpu_custom_call.1} parent=1 // pred_check
      _
    $region31: #{tpu_custom_call.1} parent=1 // pred_check_branch
      %116 = sbr.rel (0) target = $region33
    $region32: #{tpu_custom_call.1} parent=1 // pred_region
      %117 = dma.done [#allocation6], 16
    $region33: #{tpu_custom_call.1} parent=1 // pred_fallthru
      _
    %118 = sfence
    %119 = vsyncpa [#allocation5], 1
    %120 = vsyncpa [#allocation8], 1
    %121 = vsyncpa [#allocation6], 1

</llo_original>
